<compile_context>
chip_gen: v7x
topology: tpu7x:2x2x1
jax: 0.10.0
libtpu: 0.0.40
codegen_flags: <defaults>
</compile_context>

<pallas_src>
import math

import jax
import jax.numpy as jnp
from jax.experimental import pallas as pl
from jax.experimental.pallas import tpu as pltpu


def _standardize_kernel(x_ref, ab_ref, o_ref):
    # x_ref : (row_tile, W) lane-dense slab of the flattened input.
    # ab_ref: (2, W) resident constants; row 0 = mu tiled, row 1 = 1/sigma tiled,
    #         so lane p of a row corresponds to feature p % F.
    mu = ab_ref[0:1, :]
    inv_sigma = ab_ref[1:2, :]
    o_ref[...] = (x_ref[...] - mu) * inv_sigma


def _pick_block_config():
    """(block_bytes, vmem_limit_bytes), generation-aware but safe by default."""
    block_bytes = 4 << 20          # v5e / v6e: 4 MiB blocks, 4 live buffers = 16 MiB
    vmem_limit = 28 << 20          # explicit, above v5e's 16 MiB default scoped limit
    try:
        info = pltpu.get_tpu_info()
        vmem = getattr(info, "vmem_capacity_bytes", None)
        if vmem is not None and int(vmem) <= (64 << 20):
            # v7x: 64 MiB VMEM per TC, 3.2 TB/s HBM -> bigger blocks amortize
            # the ~0.35 us per-grid-step cost.  4 live buffers = 24 MiB.
            block_bytes = 6 << 20
            vmem_limit = 40 << 20
    except Exception:
        pass
    return block_bytes, vmem_limit


def _run_rows(x2d, ab, block_bytes, vmem_limit):
    """Run the elementwise kernel over a (rows, W) lane-dense slab."""
    rows, W = x2d.shape
    dtype = x2d.dtype
    itemsize = jnp.dtype(dtype).itemsize

    if rows <= 8:
        row_tile = rows  # full-extent block (always legal)
    else:
        budget = max(8, ((block_bytes // (W * itemsize)) // 8) * 8)
        # Keep at least 2 grid steps so both v7x TensorCores get work.
        half = max(8, ((rows // 2) // 8) * 8)
        row_tile = min(budget, half)

    grid = (pl.cdiv(rows, row_tile),)

    return pl.pallas_call(
        _standardize_kernel,
        out_shape=jax.ShapeDtypeStruct((rows, W), dtype),
        grid=grid,
        in_specs=[
            pl.BlockSpec((row_tile, W), lambda i: (i, 0)),  # x rows tile
            pl.BlockSpec((2, W), lambda i: (0, 0)),          # constants (resident)
        ],
        out_specs=pl.BlockSpec((row_tile, W), lambda i: (i, 0)),
        compiler_params=pltpu.CompilerParams(
            dimension_semantics=("parallel",),
            vmem_limit_bytes=vmem_limit,
        ),
        cost_estimate=pl.CostEstimate(
            flops=2 * rows * W,
            transcendentals=0,
            bytes_accessed=2 * rows * W * itemsize,
        ),
    )(x2d, ab)


def standardizer_sequence_forward(x, mu, sigma):
    """Equivalent of StandardizerSequence.forward for a fitted module.

    x:     (B, S, F)  float32
    mu:    (F,)       float32
    sigma: (F,)       float32
    returns (B, S, F) float32
    """
    assert x.ndim == 3, "expects 3-D input (B, S, n_feats)"
    B, S, F = x.shape
    dtype = x.dtype

    # Per-feature constants, folded once in the wrapper (only F elements).
    mu_c = mu.astype(dtype)
    inv_sigma_c = (1.0 / sigma).astype(dtype)

    # Lane-dense width: lcm(F, 128).  A W-wide row is an integer number of
    # 128-lane vregs AND an integer number of feature periods.
    W = (F * 128) // math.gcd(F, 128)
    reps = W // F
    ab = jnp.stack([jnp.tile(mu_c, reps), jnp.tile(inv_sigma_c, reps)], axis=0)  # (2, W)

    block_bytes, vmem_limit = _pick_block_config()

    BS = B * S
    if BS % reps == 0:
        # Fast path: free contiguous reshape, no padding, no output slice.
        rows = BS // reps
        x2d = x.reshape(rows, W)
        out2d = _run_rows(x2d, ab, block_bytes, vmem_limit)
        return out2d.reshape(B, S, F)

    # Rare fallback: pad the flat input only up to the next multiple of W
    # (< W extra elements); padded tail is dropped after the call, so the
    # padded values never leak into the returned array.
    N = BS * F
    rows = pl.cdiv(N, W)
    n_padded = rows * W
    x_flat = x.reshape(-1)
    x_flat = jnp.pad(x_flat, (0, n_padded - N))
    out2d = _run_rows(x_flat.reshape(rows, W), ab, block_bytes, vmem_limit)
    return out2d.reshape(-1)[:N].reshape(B, S, F)


if __name__ == "__main__":
    key = jax.random.PRNGKey(0)
    kx1, kx2, kmu, ksig = jax.random.split(key, 4)

    F = 20
    # Deterministic "fitted" parameters (module shapes: mu=(F,), sigma=(F,)).
    mu = jax.random.normal(kmu, (F,), dtype=jnp.float32) * 0.5
    sigma = jnp.abs(jax.random.normal(ksig, (F,), dtype=jnp.float32)) + 0.5

    def ref(x):
        return ((x.reshape(-1, F) - mu) / sigma).reshape(x.shape)

    # Case 1: module-consistent small shape (B=2, S=8) -> exercises the
    # fallback (padded) path since B*S=16 is not a multiple of W//F=32.
    x1 = jax.random.normal(kx1, (2, 8, F), dtype=jnp.float32)
    out1 = jax.block_until_ready(standardizer_sequence_forward(x1, mu, sigma))
    assert out1.shape == x1.shape and out1.dtype == x1.dtype
    assert jnp.allclose(out1, ref(x1), atol=1e-5, rtol=1e-5)

    # Case 2: B*S divisible by W//F -> exercises the zero-copy fast path.
    x2 = jax.random.normal(kx2, (4, 16, F), dtype=jnp.float32)
    out2 = jax.block_until_ready(standardizer_sequence_forward(x2, mu, sigma))
    assert out2.shape == x2.shape and out2.dtype == x2.dtype
    assert jnp.allclose(out2, ref(x2), atol=1e-5, rtol=1e-5)

    print("KERNEL_OK")
</pallas_src>

<mosaic_0001>
module attributes {stable_mosaic.version = 11 : i64} {
  func.func @_standardize_kernel(%arg0: i32, %arg1: memref<1x640xf32, #tpu.memory_space<vmem>>, %arg2: memref<2x640xf32, #tpu.memory_space<vmem>>, %arg3: memref<1x640xf32, #tpu.memory_space<vmem>>) attributes {dimension_semantics = [#tpu.dimension_semantics<parallel>], iteration_bounds = array<i64: 1>, scalar_prefetch = 0 : i64, scratch_operands = 0 : i64, tpu.core_type = #tpu.core_type<tc>, window_params = [{transform_indices = @transform_0, window_bounds = array<i64: 1, 640>}, {pipeline_mode = #tpu.pipeline_mode<synchronous>, transform_indices = @transform_1, window_bounds = array<i64: 2, 640>}, {transform_indices = @transform_2, window_bounds = array<i64: 1, 640>}]} {
    %c0 = arith.constant 0 : index
    %c0_0 = arith.constant 0 : index
    %0 = vector.load %arg2[%c0, %c0_0] : memref<2x640xf32, #tpu.memory_space<vmem>>, vector<1x640xf32>
    %c1 = arith.constant 1 : index
    %c0_1 = arith.constant 0 : index
    %1 = vector.load %arg2[%c1, %c0_1] : memref<2x640xf32, #tpu.memory_space<vmem>>, vector<1x640xf32>
    %c0_2 = arith.constant 0 : index
    %c0_3 = arith.constant 0 : index
    %2 = vector.load %arg1[%c0_2, %c0_3] : memref<1x640xf32, #tpu.memory_space<vmem>>, vector<1x640xf32>
    %3 = arith.subf %2, %0 : vector<1x640xf32>
    %4 = arith.mulf %3, %1 : vector<1x640xf32>
    %c0_4 = arith.constant 0 : index
    %c0_5 = arith.constant 0 : index
    %5 = vector.load %arg3[%c0_4, %c0_5] : memref<1x640xf32, #tpu.memory_space<vmem>>, vector<1x640xf32>
    tpu.vector_store %arg3[%c0_4, %c0_5], %4 {strides = array<i32>} : memref<1x640xf32, #tpu.memory_space<vmem>>, vector<1x640xf32>,
    return
  }
  func.func @transform_0(%arg0: i32) -> (i32, i32) {
    %c0_i32 = arith.constant 0 : i32
    %c0_i32_0 = arith.constant 0 : i32
    return %arg0, %c0_i32 : i32, i32
  }
  func.func @transform_1(%arg0: i32) -> (i32, i32) {
    %c0_i32 = arith.constant 0 : i32
    %c0_i32_0 = arith.constant 0 : i32
    %c0_i32_1 = arith.constant 0 : i32
    return %c0_i32, %c0_i32_0 : i32, i32
  }
  func.func @transform_2(%arg0: i32) -> (i32, i32) {
    %c0_i32 = arith.constant 0 : i32
    %c0_i32_0 = arith.constant 0 : i32
    return %arg0, %c0_i32 : i32, i32
  }
}

</mosaic_0001>

<llo_original>
// kernel: tpu_custom_call.1
$region0: #{tpu_custom_call.1}
  #allocation0 [shape = 'u32[]', space=smem, size = 0x4, offset = 0x4, fixed_abs, tag = 'smem constant byte address 0x4 - core index']
  #allocation1 [shape = 'u32[144,128]{1,0:T(1,128)}', space=vmem, size = 0x12000, scoped, tag = 'internal scratch']
  %s0 = inlined_call_operand.hbm [shape: f32[1,640], index: 0, kind: input, shape index: {}]
  %s1 = inlined_call_operand.hbm [shape: f32[2,640], index: 1, kind: input, shape index: {}]
  %s2 = inlined_call_operand.hbm [shape: f32[1,640], index: 2, kind: output, shape index: {}]
  %s3 = sld [smem:[#allocation0]]
  $region26: #{tpu_custom_call.1} parent=0
    _
  %s5 = ssub.s32 1, %s3
  %s6 = scalar_select 0, %s5, %s3
  $region1: #{tpu_custom_call.1} parent=0
    #allocation2 [shape = 'u8[2560]{0}', space=vmem, size = 0xc00, scoped, tag = 'input window, operand 0, single buffered']
    #allocation3 [shape = 's32[1]{0}', space=sflag, size = 0x4, scoped, tag = 'scoped memory for tpu_custom_call.1']
    #allocation4 [shape = 's32[1]{0}', space=sflag, size = 0x4, scoped, tag = 'scoped memory for tpu_custom_call.1']
    #allocation5 [shape = 'u8[5120]{0}', space=vmem, size = 0x1400, scoped, tag = 'input window, operand 1, single buffered']
    #allocation6 [shape = 's32[1]{0}', space=sflag, size = 0x4, scoped, tag = 'scoped memory for tpu_custom_call.1']
    #allocation7 [shape = 'u8[2560]{0}', space=vmem, size = 0xc00, scoped, tag = 'output window, operand 0, single buffered']
    %7 = vsyncpa [#allocation3], 0
    %8 = vsyncpa [#allocation6], 0
    %9 = vsyncpa [#allocation4], 0
    // Predicated region
    $region2: #{tpu_custom_call.1} parent=1 // pred_check
      _
    $region3: #{tpu_custom_call.1} parent=1 // pred_check_branch
      %11 = sbr.rel (0) target = $region5
    $region4: #{tpu_custom_call.1} parent=1 // pred_region
      %s13 = ssub.s32 80, 80
      %14 = vsyncadd [#allocation3], %s13
      %s16 = sshll.u32 [#allocation2], 4
      %s17 = int_to_ptr.vmem [resolvable:$true] %s16
      %19 = dma.hbm_to_vmem [thread:$0]  %s0, 80, %s17, [#allocation3]
    $region5: #{tpu_custom_call.1} parent=1 // pred_fallthru
      _
    // Predicated region
    $region6: #{tpu_custom_call.1} parent=1 // pred_check
      _
    $region7: #{tpu_custom_call.1} parent=1 // pred_check_branch
      %21 = sbr.rel (0) target = $region9
    $region8: #{tpu_custom_call.1} parent=1 // pred_region
      %s23 = ssub.s32 160, 160
      %24 = vsyncadd [#allocation6], %s23
      %s26 = sshll.u32 [#allocation5], 4
      %s27 = int_to_ptr.vmem [resolvable:$true] %s26
      %29 = dma.hbm_to_vmem [thread:$0]  %s1, 160, %s27, [#allocation6]
    $region9: #{tpu_custom_call.1} parent=1 // pred_fallthru
      _
    // Predicated region
    $region10: #{tpu_custom_call.1} parent=1 // pred_check
      _
    $region11: #{tpu_custom_call.1} parent=1 // pred_check_branch
      %31 = sbr.rel (0) target = $region13
    $region12: #{tpu_custom_call.1} parent=1 // pred_region
      %32 = dma.done [#allocation3], 80
    $region13: #{tpu_custom_call.1} parent=1 // pred_fallthru
      _
    // Predicated region
    $region14: #{tpu_custom_call.1} parent=1 // pred_check
      _
    $region15: #{tpu_custom_call.1} parent=1 // pred_check_branch
      %34 = sbr.rel (0) target = $region17
    $region16: #{tpu_custom_call.1} parent=1 // pred_region
      %35 = dma.done [#allocation6], 160
    $region17: #{tpu_custom_call.1} parent=1 // pred_fallthru
      _
    %v36 = vld [vmem:[#allocation5] ss:$2 sm:$0x1f]
    %s37 = scalar_lea.vmem [#allocation5], 1
    %v38 = vld [vmem:[%s37] ss:$2 sm:$0x1f]
    %v39 = vld [vmem:[#allocation2] sm:$0x1f]
    %v40 = vsub.f32 %v39, %v36
    %v41 = vmul.f32 %v40, %v38
    %v42 = vlaneseq
    %vm43 = vcmp.ge.s32.totalorder %v42, 0
    %vm44 = vcmp.lt.s32.totalorder %v42, 640
    %vm45 = vmand %vm43, %vm44
    %46 = vst.msk [vmem:[#allocation7] sm:$0x1f] %vm45, %v41
    // Predicated region
    $region18: #{tpu_custom_call.1} parent=1 // pred_check
      _
    $region19: #{tpu_custom_call.1} parent=1 // pred_check_branch
      %48 = sbr.rel (0) target = $region21
    $region20: #{tpu_custom_call.1} parent=1 // pred_region
      %s50 = ssub.s32 80, 80
      %51 = vsyncadd [#allocation4], %s50
      %s53 = sshll.u32 [#allocation7], 4
      %s54 = int_to_ptr.vmem [resolvable:$true] %s53
      %56 = dma.vmem_to_hbm [thread:$0]  %s54, 80, %s2, [#allocation4]
    $region21: #{tpu_custom_call.1} parent=1 // pred_fallthru
      _
    // Predicated region
    $region22: #{tpu_custom_call.1} parent=1 // pred_check
      _
    $region23: #{tpu_custom_call.1} parent=1 // pred_check_branch
      %58 = sbr.rel (0) target = $region25
    $region24: #{tpu_custom_call.1} parent=1 // pred_region
      %59 = dma.done [#allocation4], 80
    $region25: #{tpu_custom_call.1} parent=1 // pred_fallthru
      _
    %60 = vsyncpa [#allocation3], 1
    %61 = vsyncpa [#allocation6], 1
    %62 = vsyncpa [#allocation4], 1

</llo_original>
